<compile_context>
chip_gen: v7x
topology: tpu7x:2x2x1
jax: 0.10.0
libtpu: 0.0.40
codegen_flags: <defaults>
</compile_context>

<pallas_src>
import functools

import jax
import jax.numpy as jnp
from jax.experimental import pallas as pl
from jax.experimental.pallas import tpu as pltpu


# ---------------------------------------------------------------------------
# Pallas kernel: routed weighted sum over cells for one (spatial tile, path).
# ---------------------------------------------------------------------------
def _fusion_kernel(p_ref, x1_ref, x2_ref, o1_ref, o2_ref, *, num_cell):
    # p_ref : (1, NC, B)        -- already normalized in the wrapper
    # x1/x2 : (NC, B, C, HWt)   -- spatial-tile block, shared across paths
    # o1/o2 : (1, B, C, HWt)
    p = p_ref[0]                                  # (NC, B)

    w0 = p[0][:, None, None]                      # (B, 1, 1)
    acc1 = w0 * x1_ref[0]
    acc2 = w0 * x2_ref[0]
    for j in range(1, num_cell):                  # small, static unroll
        wj = p[j][:, None, None]
        acc1 = acc1 + wj * x1_ref[j]
        acc2 = acc2 + wj * x2_ref[j]

    o1_ref[0] = acc1
    o2_ref[0] = acc2


# ---------------------------------------------------------------------------
# Router (hoisted out of the Pallas grid, per perf review): computed once with
# plain JAX -- a tiny reduction + MLP chain that XLA maps to the MXU.
# ---------------------------------------------------------------------------
def _router_probs(x1s, x2s, params, num_out_path, eps):
    w1, b1, w2, b2 = params                       # (NC,C,Hd) (NC,Hd) (NC,Hd,NOP) (NC,NOP)
    pooled = jnp.mean(x1s + x2s, axis=-1)         # GAP over HW -> (NC, B, C)
    h = jax.nn.relu(
        jnp.einsum('nbc,nck->nbk', pooled, w1,
                   preferred_element_type=jnp.float32) + b1[:, None, :])
    p = jax.nn.sigmoid(
        jnp.einsum('nbk,nko->nbo', h, w2,
                   preferred_element_type=jnp.float32) + b2[:, None, :])  # (NC, B, NOP)
    if num_out_path > 1:
        # normalize over cells (matches torch: sum over dim=-1 of (B,NOP,NC))
        p = p / (jnp.sum(p, axis=0, keepdims=True) + eps)
    return jnp.transpose(p, (2, 0, 1)).astype(jnp.float32)     # (NOP, NC, B)


def _pick_hw_tile(num_cell, B, C, HW, vmem_budget_bytes=24 * 1024 * 1024):
    """Largest 128-multiple HW tile dividing HW whose double-buffered working
    set (2 inputs + 2 outputs, f32) stays under the VMEM budget."""
    if HW % 128 != 0:
        # Full-extent block is always legal.
        # TODO(synk): pad HW to a multiple of 128 for large unaligned shapes.
        return HW
    per_hw_elem = 4 * (2 * 2 * num_cell * B * C + 2 * 2 * B * C)
    cap = min(HW, 2048,
              max(128, (vmem_budget_bytes // per_hw_elem) // 128 * 128))
    best, t = 128, 128
    while t <= cap:
        if HW % t == 0:
            best = t
        t += 128
    return best


def dynamic_fusion_forward(aggr_embed, params, num_out_path, eps=1e-8):
    """aggr_embed: list of num_cell pairs [x1, x2], each (B, C, H, W) float32."""
    num_cell = len(aggr_embed)
    x1s = jnp.stack([pair[0] for pair in aggr_embed], axis=0)   # (NC, B, C, H, W)
    x2s = jnp.stack([pair[1] for pair in aggr_embed], axis=0)
    NC, B, C, H, W = x1s.shape
    HW = H * W
    x1s = x1s.reshape(NC, B, C, HW).astype(jnp.float32)
    x2s = x2s.reshape(NC, B, C, HW).astype(jnp.float32)

    # One-shot router -> (NOP, NC, B) normalized path weights.
    probs = _router_probs(x1s, x2s, params, num_out_path, eps)

    HWt = _pick_hw_tile(NC, B, C, HW)
    T = HW // HWt

    kernel = functools.partial(_fusion_kernel, num_cell=NC)

    out1, out2 = pl.pallas_call(
        kernel,
        grid=(T, num_out_path),           # spatial tiles outer, paths inner
        in_specs=[
            # path weights: select column i purely via index_map
            pl.BlockSpec((1, NC, B), lambda t, p: (p, 0, 0)),
            # inputs indexed by spatial tile only -> DMA'd once, reused per path
            pl.BlockSpec((NC, B, C, HWt), lambda t, p: (0, 0, 0, t)),
            pl.BlockSpec((NC, B, C, HWt), lambda t, p: (0, 0, 0, t)),
        ],
        out_specs=[
            pl.BlockSpec((1, B, C, HWt), lambda t, p: (p, 0, 0, t)),
            pl.BlockSpec((1, B, C, HWt), lambda t, p: (p, 0, 0, t)),
        ],
        out_shape=(
            jax.ShapeDtypeStruct((num_out_path, B, C, HW), jnp.float32),
            jax.ShapeDtypeStruct((num_out_path, B, C, HW), jnp.float32),
        ),
        compiler_params=pltpu.CompilerParams(
            dimension_semantics=("parallel", "arbitrary"),
            vmem_limit_bytes=32 * 1024 * 1024,
        ),
    )(probs, x1s, x2s)

    out1 = out1.reshape(num_out_path, B, C, H, W)
    out2 = out2.reshape(num_out_path, B, C, H, W)
    return [[out1[i], out2[i]] for i in range(num_out_path)]


def init_params(key, num_cell, channels, embed_size, num_out_path):
    ks = jax.random.split(key, 4)
    w1 = 0.1 * jax.random.normal(ks[0], (num_cell, channels, embed_size), jnp.float32)
    b1 = 0.1 * jax.random.normal(ks[1], (num_cell, embed_size), jnp.float32)
    w2 = 0.1 * jax.random.normal(ks[2], (num_cell, embed_size, num_out_path), jnp.float32)
    b2 = 0.1 * jax.random.normal(ks[3], (num_cell, num_out_path), jnp.float32)
    return w1, b1, w2, b2


def reference_forward(aggr_embed, params, num_out_path, eps=1e-8):
    """Pure-JAX mirror of DynamicFusion_Layer.forward (same cell assumption)."""
    w1, b1, w2, b2 = params
    num_cell = len(aggr_embed)
    emb_lst, path_prob = [], []
    for j in range(num_cell):
        x1, x2 = aggr_embed[j]
        pooled = jnp.mean(x1 + x2, axis=(2, 3))                      # (B, C)
        h = jax.nn.relu(pooled @ w1[j] + b1[j])
        p = jax.nn.sigmoid(h @ w2[j] + b2[j])                        # (B, NOP)
        emb_lst.append([x1, x2])
        path_prob.append(p)
    res = []
    if num_out_path == 1:
        r1 = 0.0
        r2 = 0.0
        for j in range(num_cell):
            cur = path_prob[j][:, :, None, None]                     # (B,1,1,1)
            r1 = r1 + cur * emb_lst[j][0]
            r2 = r2 + cur * emb_lst[j][1]
        res.append([r1, r2])
    else:
        all_p = jnp.stack(path_prob, axis=2)                         # (B, NOP, NC)
        all_p = all_p / (jnp.sum(all_p, axis=-1, keepdims=True) + eps)
        for i in range(num_out_path):
            r1 = 0.0
            r2 = 0.0
            for j in range(num_cell):
                cur = all_p[:, i, j][:, None, None, None]
                r1 = r1 + cur * emb_lst[j][0]
                r2 = r2 + cur * emb_lst[j][1]
            res.append([r1, r2])
    return res


if __name__ == "__main__":
    num_cell, num_out_path, embed_size = 4, 4, 8
    B, C, H, W = 2, 4, 16, 16

    key = jax.random.PRNGKey(0)
    kx, kp = jax.random.split(key)
    xs = jax.random.normal(kx, (num_cell, 2, B, C, H, W), jnp.float32)
    aggr_embed = [[xs[j, 0], xs[j, 1]] for j in range(num_cell)]
    params = init_params(kp, num_cell, C, embed_size, num_out_path)

    out = dynamic_fusion_forward(aggr_embed, params, num_out_path)
    out = jax.block_until_ready(out)

    ref = reference_forward(aggr_embed, params, num_out_path)
    for i in range(num_out_path):
        for k in range(2):
            assert jnp.allclose(out[i][k], ref[i][k], atol=1e-5, rtol=1e-5), \
                f"mismatch at path {i}, modality {k}"

    print("KERNEL_OK")
</pallas_src>

<mosaic_0001>
module attributes {stable_mosaic.version = 11 : i64} {
  func.func @_fusion_kernel(%arg0: i32, %arg1: i32, %arg2: memref<1x4x2xf32, #tpu.memory_space<vmem>>, %arg3: memref<4x2x4x256xf32, #tpu.memory_space<vmem>>, %arg4: memref<4x2x4x256xf32, #tpu.memory_space<vmem>>, %arg5: memref<1x2x4x256xf32, #tpu.memory_space<vmem>>, %arg6: memref<1x2x4x256xf32, #tpu.memory_space<vmem>>) attributes {dimension_semantics = [#tpu.dimension_semantics<parallel>, #tpu.dimension_semantics<arbitrary>], iteration_bounds = array<i64: 1, 4>, scalar_prefetch = 0 : i64, scratch_operands = 0 : i64, tpu.core_type = #tpu.core_type<tc>, window_params = [{transform_indices = @transform_0, window_bounds = array<i64: 1, 4, 2>}, {transform_indices = @transform_1, window_bounds = array<i64: 4, 2, 4, 256>}, {transform_indices = @transform_2, window_bounds = array<i64: 4, 2, 4, 256>}, {transform_indices = @transform_3, window_bounds = array<i64: 1, 2, 4, 256>}, {transform_indices = @transform_4, window_bounds = array<i64: 1, 2, 4, 256>}]} {
    %c0 = arith.constant 0 : index
    %c0_0 = arith.constant 0 : index
    %c0_1 = arith.constant 0 : index
    %0 = vector.load %arg2[%c0, %c0_0, %c0_1] : memref<1x4x2xf32, #tpu.memory_space<vmem>>, vector<1x4x2xf32>
    %1 = vector.shape_cast %0 : vector<1x4x2xf32> to vector<4x2xf32>
    %2 = vector.extract_strided_slice %1 {offsets = [0, 0], sizes = [1, 2], strides = [1, 1]} : vector<4x2xf32> to vector<1x2xf32>
    %3 = vector.shape_cast %2 : vector<1x2xf32> to vector<2xf32>
    %4 = vector.shape_cast %3 : vector<2xf32> to vector<2x1x1xf32>
    %c0_2 = arith.constant 0 : index
    %c0_3 = arith.constant 0 : index
    %c0_4 = arith.constant 0 : index
    %c0_5 = arith.constant 0 : index
    %5 = vector.load %arg3[%c0_2, %c0_3, %c0_4, %c0_5] : memref<4x2x4x256xf32, #tpu.memory_space<vmem>>, vector<1x2x4x256xf32>
    %6 = vector.shape_cast %5 : vector<1x2x4x256xf32> to vector<2x4x256xf32>
    %7 = vector.broadcast %4 : vector<2x1x1xf32> to vector<2x4x256xf32>
    %8 = arith.mulf %7, %6 : vector<2x4x256xf32>
    %c0_6 = arith.constant 0 : index
    %c0_7 = arith.constant 0 : index
    %c0_8 = arith.constant 0 : index
    %c0_9 = arith.constant 0 : index
    %9 = vector.load %arg4[%c0_6, %c0_7, %c0_8, %c0_9] : memref<4x2x4x256xf32, #tpu.memory_space<vmem>>, vector<1x2x4x256xf32>
    %10 = vector.shape_cast %9 : vector<1x2x4x256xf32> to vector<2x4x256xf32>
    %11 = vector.broadcast %4 : vector<2x1x1xf32> to vector<2x4x256xf32>
    %12 = arith.mulf %11, %10 : vector<2x4x256xf32>
    %13 = vector.extract_strided_slice %1 {offsets = [1, 0], sizes = [1, 2], strides = [1, 1]} : vector<4x2xf32> to vector<1x2xf32>
    %14 = vector.shape_cast %13 : vector<1x2xf32> to vector<2xf32>
    %15 = vector.shape_cast %14 : vector<2xf32> to vector<2x1x1xf32>
    %c1 = arith.constant 1 : index
    %c0_10 = arith.constant 0 : index
    %c0_11 = arith.constant 0 : index
    %c0_12 = arith.constant 0 : index
    %16 = vector.load %arg3[%c1, %c0_10, %c0_11, %c0_12] : memref<4x2x4x256xf32, #tpu.memory_space<vmem>>, vector<1x2x4x256xf32>
    %17 = vector.shape_cast %16 : vector<1x2x4x256xf32> to vector<2x4x256xf32>
    %18 = vector.broadcast %15 : vector<2x1x1xf32> to vector<2x4x256xf32>
    %19 = arith.mulf %18, %17 : vector<2x4x256xf32>
    %20 = arith.addf %8, %19 : vector<2x4x256xf32>
    %c1_13 = arith.constant 1 : index
    %c0_14 = arith.constant 0 : index
    %c0_15 = arith.constant 0 : index
    %c0_16 = arith.constant 0 : index
    %21 = vector.load %arg4[%c1_13, %c0_14, %c0_15, %c0_16] : memref<4x2x4x256xf32, #tpu.memory_space<vmem>>, vector<1x2x4x256xf32>
    %22 = vector.shape_cast %21 : vector<1x2x4x256xf32> to vector<2x4x256xf32>
    %23 = vector.broadcast %15 : vector<2x1x1xf32> to vector<2x4x256xf32>
    %24 = arith.mulf %23, %22 : vector<2x4x256xf32>
    %25 = arith.addf %12, %24 : vector<2x4x256xf32>
    %26 = vector.extract_strided_slice %1 {offsets = [2, 0], sizes = [1, 2], strides = [1, 1]} : vector<4x2xf32> to vector<1x2xf32>
    %27 = vector.shape_cast %26 : vector<1x2xf32> to vector<2xf32>
    %28 = vector.shape_cast %27 : vector<2xf32> to vector<2x1x1xf32>
    %c2 = arith.constant 2 : index
    %c0_17 = arith.constant 0 : index
    %c0_18 = arith.constant 0 : index
    %c0_19 = arith.constant 0 : index
    %29 = vector.load %arg3[%c2, %c0_17, %c0_18, %c0_19] : memref<4x2x4x256xf32, #tpu.memory_space<vmem>>, vector<1x2x4x256xf32>
    %30 = vector.shape_cast %29 : vector<1x2x4x256xf32> to vector<2x4x256xf32>
    %31 = vector.broadcast %28 : vector<2x1x1xf32> to vector<2x4x256xf32>
    %32 = arith.mulf %31, %30 : vector<2x4x256xf32>
    %33 = arith.addf %20, %32 : vector<2x4x256xf32>
    %c2_20 = arith.constant 2 : index
    %c0_21 = arith.constant 0 : index
    %c0_22 = arith.constant 0 : index
    %c0_23 = arith.constant 0 : index
    %34 = vector.load %arg4[%c2_20, %c0_21, %c0_22, %c0_23] : memref<4x2x4x256xf32, #tpu.memory_space<vmem>>, vector<1x2x4x256xf32>
    %35 = vector.shape_cast %34 : vector<1x2x4x256xf32> to vector<2x4x256xf32>
    %36 = vector.broadcast %28 : vector<2x1x1xf32> to vector<2x4x256xf32>
    %37 = arith.mulf %36, %35 : vector<2x4x256xf32>
    %38 = arith.addf %25, %37 : vector<2x4x256xf32>
    %39 = vector.extract_strided_slice %1 {offsets = [3, 0], sizes = [1, 2], strides = [1, 1]} : vector<4x2xf32> to vector<1x2xf32>
    %40 = vector.shape_cast %39 : vector<1x2xf32> to vector<2xf32>
    %41 = vector.shape_cast %40 : vector<2xf32> to vector<2x1x1xf32>
    %c3 = arith.constant 3 : index
    %c0_24 = arith.constant 0 : index
    %c0_25 = arith.constant 0 : index
    %c0_26 = arith.constant 0 : index
    %42 = vector.load %arg3[%c3, %c0_24, %c0_25, %c0_26] : memref<4x2x4x256xf32, #tpu.memory_space<vmem>>, vector<1x2x4x256xf32>
    %43 = vector.shape_cast %42 : vector<1x2x4x256xf32> to vector<2x4x256xf32>
    %44 = vector.broadcast %41 : vector<2x1x1xf32> to vector<2x4x256xf32>
    %45 = arith.mulf %44, %43 : vector<2x4x256xf32>
    %46 = arith.addf %33, %45 : vector<2x4x256xf32>
    %c3_27 = arith.constant 3 : index
    %c0_28 = arith.constant 0 : index
    %c0_29 = arith.constant 0 : index
    %c0_30 = arith.constant 0 : index
    %47 = vector.load %arg4[%c3_27, %c0_28, %c0_29, %c0_30] : memref<4x2x4x256xf32, #tpu.memory_space<vmem>>, vector<1x2x4x256xf32>
    %48 = vector.shape_cast %47 : vector<1x2x4x256xf32> to vector<2x4x256xf32>
    %49 = vector.broadcast %41 : vector<2x1x1xf32> to vector<2x4x256xf32>
    %50 = arith.mulf %49, %48 : vector<2x4x256xf32>
    %51 = arith.addf %38, %50 : vector<2x4x256xf32>
    %c0_31 = arith.constant 0 : index
    %c0_32 = arith.constant 0 : index
    %c0_33 = arith.constant 0 : index
    %c0_34 = arith.constant 0 : index
    %52 = vector.load %arg5[%c0_31, %c0_32, %c0_33, %c0_34] : memref<1x2x4x256xf32, #tpu.memory_space<vmem>>, vector<1x2x4x256xf32>
    %53 = vector.shape_cast %52 : vector<1x2x4x256xf32> to vector<2x4x256xf32>
    %54 = vector.shape_cast %46 : vector<2x4x256xf32> to vector<1x2x4x256xf32>
    tpu.vector_store %arg5[%c0_31, %c0_32, %c0_33, %c0_34], %54 {strides = array<i32>} : memref<1x2x4x256xf32, #tpu.memory_space<vmem>>, vector<1x2x4x256xf32>,
    %c0_35 = arith.constant 0 : index
    %c0_36 = arith.constant 0 : index
    %c0_37 = arith.constant 0 : index
    %c0_38 = arith.constant 0 : index
    %55 = vector.load %arg6[%c0_35, %c0_36, %c0_37, %c0_38] : memref<1x2x4x256xf32, #tpu.memory_space<vmem>>, vector<1x2x4x256xf32>
    %56 = vector.shape_cast %55 : vector<1x2x4x256xf32> to vector<2x4x256xf32>
    %57 = vector.shape_cast %51 : vector<2x4x256xf32> to vector<1x2x4x256xf32>
    tpu.vector_store %arg6[%c0_35, %c0_36, %c0_37, %c0_38], %57 {strides = array<i32>} : memref<1x2x4x256xf32, #tpu.memory_space<vmem>>, vector<1x2x4x256xf32>,
    return
  }
  func.func @transform_0(%arg0: i32, %arg1: i32) -> (i32, i32, i32) {
    %c0_i32 = arith.constant 0 : i32
    %c0_i32_0 = arith.constant 0 : i32
    %c0_i32_1 = arith.constant 0 : i32
    return %arg1, %c0_i32, %c0_i32_0 : i32, i32, i32
  }
  func.func @transform_1(%arg0: i32, %arg1: i32) -> (i32, i32, i32, i32) {
    %c0_i32 = arith.constant 0 : i32
    %c0_i32_0 = arith.constant 0 : i32
    %c0_i32_1 = arith.constant 0 : i32
    %c0_i32_2 = arith.constant 0 : i32
    return %c0_i32, %c0_i32_0, %c0_i32_1, %arg0 : i32, i32, i32, i32
  }
  func.func @transform_2(%arg0: i32, %arg1: i32) -> (i32, i32, i32, i32) {
    %c0_i32 = arith.constant 0 : i32
    %c0_i32_0 = arith.constant 0 : i32
    %c0_i32_1 = arith.constant 0 : i32
    %c0_i32_2 = arith.constant 0 : i32
    return %c0_i32, %c0_i32_0, %c0_i32_1, %arg0 : i32, i32, i32, i32
  }
  func.func @transform_3(%arg0: i32, %arg1: i32) -> (i32, i32, i32, i32) {
    %c0_i32 = arith.constant 0 : i32
    %c0_i32_0 = arith.constant 0 : i32
    %c0_i32_1 = arith.constant 0 : i32
    return %arg1, %c0_i32, %c0_i32_0, %arg0 : i32, i32, i32, i32
  }
  func.func @transform_4(%arg0: i32, %arg1: i32) -> (i32, i32, i32, i32) {
    %c0_i32 = arith.constant 0 : i32
    %c0_i32_0 = arith.constant 0 : i32
    %c0_i32_1 = arith.constant 0 : i32
    return %arg1, %c0_i32, %c0_i32_0, %arg0 : i32, i32, i32, i32
  }
}

</mosaic_0001>

<llo_original>
// kernel: tpu_custom_call.1
$region0: #{tpu_custom_call.1}
  #allocation0 [shape = 'u32[]', space=smem, size = 0x4, offset = 0x4, fixed_abs, tag = 'smem constant byte address 0x4 - core index']
  #allocation1 [shape = 'u32[144,128]{1,0:T(1,128)}', space=vmem, size = 0x12000, scoped, tag = 'internal scratch']
  %s0 = inlined_call_operand.vmem [shape: f32[4,4,2], index: 0, kind: input, shape index: {}]
  %s1 = inlined_call_operand.hbm [shape: f32[4,2,4,256], index: 1, kind: input, shape index: {}]
  %s2 = inlined_call_operand.hbm [shape: f32[4,2,4,256], index: 2, kind: input, shape index: {}]
  %s3 = inlined_call_operand.hbm [shape: f32[4,2,4,256], index: 3, kind: output, shape index: {0}]
  %s4 = inlined_call_operand.hbm [shape: f32[4,2,4,256], index: 4, kind: output, shape index: {1}]
  %5 = xla_tuple %s3, %s4
  %s6 = sld [smem:[#allocation0]]
  $region61: #{tpu_custom_call.1} parent=0
    _
  %s8 = ssub.s32 1, %s6
  %s9 = scalar_select 0, %s8, %s6
  $region1: #{tpu_custom_call.1} parent=0
    #allocation2 [shape = 'u8[32768]{0}', space=vmem, size = 0x8000, scoped, tag = 'input window, operand 1, single buffered']
    #allocation3 [shape = 's32[2]{0}', space=sflag, size = 0x8, scoped, tag = 'scoped memory for tpu_custom_call.1']
    #allocation4 [shape = 's32[2]{0}', space=sflag, size = 0x8, scoped, tag = 'scoped memory for tpu_custom_call.1']
    #allocation5 [shape = 'u8[32768]{0}', space=vmem, size = 0x8000, scoped, tag = 'input window, operand 2, single buffered']
    #allocation6 [shape = 's32[1]{0}', space=sflag, size = 0x4, scoped, tag = 'scoped memory for tpu_custom_call.1']
    #allocation7 [shape = 'u8[16384]{0}', space=vmem, size = 0x4000, scoped, tag = 'output window, operand 0']
    #allocation8 [shape = 'u8[16384]{0}', space=vmem, size = 0x4000, scoped, tag = 'output window, operand 1']
    #allocation9 [shape = 's32[2]{0}', space=sflag, size = 0x8, scoped, tag = 'scoped memory for tpu_custom_call.1']
    %10 = vsyncpa [#allocation3], 0
    %11 = vsyncpa [#allocation6], 0
    %12 = vsyncpa [#allocation4], 0
    %s13 = scalar_lea.sflag [#allocation4], 1
    %14 = vsyncpa %s13, 0
    %15 = vsyncpa [#allocation9], 0
    %s16 = scalar_lea.sflag [#allocation9], 1
    %17 = vsyncpa %s16, 0
    loop: start=0, step=1, limit=6
    $region2: #{tpu_custom_call.1} parent=1 // loop_pre_header
      _
    $region3: #{tpu_custom_call.1} parent=1 // loop_header
      %s19 = sphi 0, %s23
      %p20 = scmp.ge.s32.totalorder %s19, 6
      %s26 = sphi 0, %s38
      %s27 = sphi 0, %s34
      %s28 = sphi 0, %s26
      %s29 = sphi 0, %s27
      %s30 = sphi 0, %s28
      %s31 = sphi 0, %s29
      %s41 = sphi 0, %s43
      %s44 = sphi 0, %s41
      %s45 = sphi 0, %s44
      %s61 = sphi 0, %s45
      %s67 = sphi 0, %s69
      %s70 = sphi 0, %s67
      %s71 = sphi 0, %s70
      %s87 = sphi 0, %s71
      %s93 = sphi 0, %s95
      %s96 = sphi 0, %s93
      %s97 = sphi 0, %s96
      %s113 = sphi 0, %s97
      %s121 = sphi 0, %s123
      %s124 = sphi 0, %s121
      %s125 = sphi 0, %s124
      %s141 = sphi 0, %s125
      %s149 = sphi 0, %s151
      %s152 = sphi 0, %s149
      %s153 = sphi 0, %s152
      %s169 = sphi 0, %s153
    $region4: #{tpu_custom_call.1} parent=1 // loop_header_branch
      %22 = sbr.rel (%p20) target = $region8
    $region5: #{tpu_custom_call.1} parent=1 // loop_body
      %s24 = ssub.s32 %s19, 1
      %s25 = ssub.s32 %s19, 2
      %s32 = sadd.s32 1, %s27
      %p33 = scmp.ge.s32.totalorder %s32, 4
      %s34 = scalar_select %p33, 0, %s32
      %s35 = sadd.s32 1, %s26
      %s36 = scalar_select %p33, %s35, %s26
      %p37 = scmp.ge.s32.totalorder %s36, 1
      %s38 = scalar_select %p37, 0, %s36
      %s39 = ssub.s32 %s27, %s34
      %p40 = scmp.eq.s32.totalorder %s39, 0
      %s42 = sadd.s32 %s41, 1
      %s43 = scalar_select %p40, %s41, %s42
      %p46 = pneg %p40
      %p47 = scmp.eq.s32.totalorder %s19, 3
      %p48 = por %p46, %p47
      %p49 = scmp.ne.s32.totalorder %s41, %s44
      %p50 = scmp.eq.s32.totalorder %s19, 0
      %p51 = por %p49, %p50
      %p52 = scmp.ne.s32.totalorder %s41, %s44
      %p53 = scmp.eq.s32.totalorder %s24, 3
      %p54 = por %p52, %p53
      %p55 = scmp.ne.s32.totalorder %s44, %s45
      %p56 = scmp.eq.s32.totalorder %s24, 0
      %p57 = por %p55, %p56
      %p58 = scmp.ne.s32.totalorder %s44, %s45
      %p59 = scmp.eq.s32.totalorder %s25, 3
      %p60 = por %p58, %p59
      %p62 = scmp.ne.s32.totalorder %s45, %s61
      %p63 = scmp.eq.s32.totalorder %s25, 0
      %p64 = por %p62, %p63
      %s65 = ssub.s32 %s26, %s38
      %p66 = scmp.eq.s32.totalorder %s65, 0
      %s68 = sadd.s32 %s67, 1
      %s69 = scalar_select %p66, %s67, %s68
      %p72 = pneg %p66
      %p73 = scmp.eq.s32.totalorder %s19, 3
      %p74 = por %p72, %p73
      %p75 = scmp.ne.s32.totalorder %s67, %s70
      %p76 = scmp.eq.s32.totalorder %s19, 0
      %p77 = por %p75, %p76
      %p78 = scmp.ne.s32.totalorder %s67, %s70
      %p79 = scmp.eq.s32.totalorder %s24, 3
      %p80 = por %p78, %p79
      %p81 = scmp.ne.s32.totalorder %s70, %s71
      %p82 = scmp.eq.s32.totalorder %s24, 0
      %p83 = por %p81, %p82
      %p84 = scmp.ne.s32.totalorder %s70, %s71
      %p85 = scmp.eq.s32.totalorder %s25, 3
      %p86 = por %p84, %p85
      %p88 = scmp.ne.s32.totalorder %s71, %s87
      %p89 = scmp.eq.s32.totalorder %s25, 0
      %p90 = por %p88, %p89
      %s91 = ssub.s32 %s26, %s38
      %p92 = scmp.eq.s32.totalorder %s91, 0
      %s94 = sadd.s32 %s93, 1
      %s95 = scalar_select %p92, %s93, %s94
      %p98 = pneg %p92
      %p99 = scmp.eq.s32.totalorder %s19, 3
      %p100 = por %p98, %p99
      %p101 = scmp.ne.s32.totalorder %s93, %s96
      %p102 = scmp.eq.s32.totalorder %s19, 0
      %p103 = por %p101, %p102
      %p104 = scmp.ne.s32.totalorder %s93, %s96
      %p105 = scmp.eq.s32.totalorder %s24, 3
      %p106 = por %p104, %p105
      %p107 = scmp.ne.s32.totalorder %s96, %s97
      %p108 = scmp.eq.s32.totalorder %s24, 0
      %p109 = por %p107, %p108
      %p110 = scmp.ne.s32.totalorder %s96, %s97
      %p111 = scmp.eq.s32.totalorder %s25, 3
      %p112 = por %p110, %p111
      %p114 = scmp.ne.s32.totalorder %s97, %s113
      %p115 = scmp.eq.s32.totalorder %s25, 0
      %p116 = por %p114, %p115
      %s117 = ssub.s32 %s27, %s34
      %s118 = ssub.s32 %s26, %s38
      %s119 = sor.u32 %s117, %s118
      %p120 = scmp.eq.s32.totalorder %s119, 0
      %s122 = sadd.s32 %s121, 1
      %s123 = scalar_select %p120, %s121, %s122
      %p126 = pneg %p120
      %p127 = scmp.eq.s32.totalorder %s19, 3
      %p128 = por %p126, %p127
      %p129 = scmp.ne.s32.totalorder %s121, %s124
      %p130 = scmp.eq.s32.totalorder %s19, 0
      %p131 = por %p129, %p130
      %p132 = scmp.ne.s32.totalorder %s121, %s124
      %p133 = scmp.eq.s32.totalorder %s24, 3
      %p134 = por %p132, %p133
      %p135 = scmp.ne.s32.totalorder %s124, %s125
      %p136 = scmp.eq.s32.totalorder %s24, 0
      %p137 = por %p135, %p136
      %p138 = scmp.ne.s32.totalorder %s124, %s125
      %p139 = scmp.eq.s32.totalorder %s25, 3
      %p140 = por %p138, %p139
      %p142 = scmp.ne.s32.totalorder %s125, %s141
      %p143 = scmp.eq.s32.totalorder %s25, 0
      %p144 = por %p142, %p143
      %s145 = ssub.s32 %s27, %s34
      %s146 = ssub.s32 %s26, %s38
      %s147 = sor.u32 %s145, %s146
      %p148 = scmp.eq.s32.totalorder %s147, 0
      %s150 = sadd.s32 %s149, 1
      %s151 = scalar_select %p148, %s149, %s150
      %p154 = pneg %p148
      %p155 = scmp.eq.s32.totalorder %s19, 3
      %p156 = por %p154, %p155
      %p157 = scmp.ne.s32.totalorder %s149, %s152
      %p158 = scmp.eq.s32.totalorder %s19, 0
      %p159 = por %p157, %p158
      %p160 = scmp.ne.s32.totalorder %s149, %s152
      %p161 = scmp.eq.s32.totalorder %s24, 3
      %p162 = por %p160, %p161
      %p163 = scmp.ne.s32.totalorder %s152, %s153
      %p164 = scmp.eq.s32.totalorder %s24, 0
      %p165 = por %p163, %p164
      %p166 = scmp.ne.s32.totalorder %s152, %s153
      %p167 = scmp.eq.s32.totalorder %s25, 3
      %p168 = por %p166, %p167
      %p170 = scmp.ne.s32.totalorder %s153, %s169
      %p171 = scmp.eq.s32.totalorder %s25, 0
      %p172 = por %p170, %p171
      %p173 = scmp.le.s32.totalorder 1, %s19
      %p174 = scmp.lt.s32.totalorder %s19, 5
      %p175 = pnand %p173, %p174
      %p176 = pneg %p175
      // Predicated region
      $region9: #{tpu_custom_call.1} parent=5 // pred_check
        _
      $region10: #{tpu_custom_call.1} parent=5 // pred_check_branch
        %178 = sbr.rel (%p175) target = $region12
      $region11: #{tpu_custom_call.1} parent=5 // pred_region
        %s179 = ssub.s32 %s19, 1
        // Predicated region
        $region13: #{tpu_custom_call.1} parent=11 // pred_check
          %p180 = pneg %p83
        $region14: #{tpu_custom_call.1} parent=11 // pred_check_branch
          %182 = sbr.rel (%p180) target = $region16
        $region15: #{tpu_custom_call.1} parent=11 // pred_region
          %s183 = smul.u32 2, %s28
          %s185 = ssub.s32 1024, 1024
          %186 = vsyncadd [#allocation3], %s185
          %s187 = smul.addr %s183, 64
          %s188 = scalar_lea.hbm %s1, %s187
          %s189 = sshll.u32 [#allocation2], 4
          %s190 = int_to_ptr.vmem [resolvable:$true] %s189
          %195 = dma.hbm_to_vmem [thread:$0]  %s188, 1024, %s190, [#allocation3], 128, 128, 8
        $region16: #{tpu_custom_call.1} parent=11 // pred_fallthru
          _
        // Predicated region
        $region17: #{tpu_custom_call.1} parent=11 // pred_check
          %p196 = pneg %p109
        $region18: #{tpu_custom_call.1} parent=11 // pred_check_branch
          %198 = sbr.rel (%p196) target = $region20
        $region19: #{tpu_custom_call.1} parent=11 // pred_region
          %s199 = smul.u32 2, %s28
          %s201 = ssub.s32 1024, 1024
          %202 = vsyncadd [#allocation6], %s201
          %s203 = smul.addr %s199, 64
          %s204 = scalar_lea.hbm %s2, %s203
          %s205 = sshll.u32 [#allocation5], 4
          %s206 = int_to_ptr.vmem [resolvable:$true] %s205
          %211 = dma.hbm_to_vmem [thread:$0]  %s204, 1024, %s206, [#allocation6], 128, 128, 8
        $region20: #{tpu_custom_call.1} parent=11 // pred_fallthru
          _
      $region12: #{tpu_custom_call.1} parent=5 // pred_fallthru
        _
      %p212 = scmp.lt.s32.totalorder %s19, 4
      // Predicated region
      $region21: #{tpu_custom_call.1} parent=5 // pred_check
        %p213 = pneg %p212
      $region22: #{tpu_custom_call.1} parent=5 // pred_check_branch
        %215 = sbr.rel (%p213) target = $region24
      $region23: #{tpu_custom_call.1} parent=5 // pred_region
        // Predicated region
        $region25: #{tpu_custom_call.1} parent=23 // pred_check
          %p216 = pneg %p51
        $region26: #{tpu_custom_call.1} parent=23 // pred_check_branch
          %218 = sbr.rel (%p216) target = $region28
        $region27: #{tpu_custom_call.1} parent=23 // pred_region
          %p219 = scmp.lt.s32.totalorder %s27, 3
          %s220 = scalar_select %p219, %s27, 3
          %s221 = smul.addr %s220, 4
          %s222 = scalar_lea.vmem %s0, %s221
        $region28: #{tpu_custom_call.1} parent=23 // pred_fallthru
          _
      $region24: #{tpu_custom_call.1} parent=5 // pred_fallthru
        _
      %p223 = scmp.le.s32.totalorder 1, %s19
      %p224 = scmp.lt.s32.totalorder %s19, 5
      %p225 = pnand %p223, %p224
      %p226 = pneg %p225
      // Predicated region
      $region29: #{tpu_custom_call.1} parent=5 // pred_check
        _
      $region30: #{tpu_custom_call.1} parent=5 // pred_check_branch
        %228 = sbr.rel (%p225) target = $region32
      $region31: #{tpu_custom_call.1} parent=5 // pred_region
        %s229 = ssub.s32 %s19, 1
        // Predicated region
        $region33: #{tpu_custom_call.1} parent=31 // pred_check
          %p230 = pneg %p83
        $region34: #{tpu_custom_call.1} parent=31 // pred_check_branch
          %232 = sbr.rel (%p230) target = $region36
        $region35: #{tpu_custom_call.1} parent=31 // pred_region
          %233 = dma.done [#allocation3], 1024
        $region36: #{tpu_custom_call.1} parent=31 // pred_fallthru
          _
        // Predicated region
        $region37: #{tpu_custom_call.1} parent=31 // pred_check
          %p234 = pneg %p109
        $region38: #{tpu_custom_call.1} parent=31 // pred_check_branch
          %236 = sbr.rel (%p234) target = $region40
        $region39: #{tpu_custom_call.1} parent=31 // pred_region
          %237 = dma.done [#allocation6], 1024
        $region40: #{tpu_custom_call.1} parent=31 // pred_fallthru
          _
        %p238 = scmp.lt.s32.totalorder %s29, 3
        %s239 = scalar_select %p238, %s29, 3
        %s240 = smul.addr %s239, 4
        %s241 = scalar_lea.vmem %s0, %s240
        %p242 = pneg %p57
        %p243 = pneg %p54
        %p244 = pneg %p83
        %p245 = pneg %p80
        %p246 = pneg %p109
        %p247 = pneg %p106
        %p248 = pneg %p137
        %p249 = pneg %p134
        %s250 = sand.u32 %s124, 1
        %s251 = scalar_lea.sflag [#allocation4], %s250
        %s252 = sand.u32 %s124, 1
        %s253 = smul.addr %s252, 16
        %s254 = scalar_lea.vmem [#allocation7], %s253
        %p255 = pneg %p165
        %p256 = pneg %p162
        %s257 = sand.u32 %s152, 1
        %s258 = scalar_lea.sflag [#allocation9], %s257
        %s259 = sand.u32 %s152, 1
        %s260 = smul.addr %s259, 16
        %s261 = scalar_lea.vmem [#allocation8], %s260
        %p262 = scmp.lt.s32.totalorder %s29, 3
        %s263 = scalar_select %p262, %s29, 3
        %s264 = smul.addr %s263, 4
        %s265 = scalar_lea.vmem %s0, %s264
        %s266 = smul.u32 2, %s28
        %s267 = smul.u32 2, %s28
        %s268 = smul.u32 2, %s28
        %s269 = smul.u32 2, %s28
        %v270 = vld [vmem:[%s265] sm:$0xf]
        %v271 = vlaneseq
        %v272 = vshrl.u32 %v271, 7
        %v273 = vsub.s32 0, %v272
        %v274 = vrot.slane %v270, %v273
        %276 = vbcast.lane.b32.xlu0 %v274, 256
        %v277 = vpop.permute.xlu0 %276
        %v278 = vlaneseq
        %v279 = vshrl.u32 %v278, 7
        %v280 = vsub.s32 0, %v279
        %v281 = vrot.slane %v277, %v280
        %v282 = vlaneseq
        %v283 = vshrl.u32 %v282, 7
        %v284 = vsub.s32 1, %v283
        %v285 = vrot.slane %v277, %v284
        %v286 = vld [vmem:[#allocation2] sm:$0xff]
        %v287 = vld [vmem:[#allocation2 + $0x8] sm:$0xff]
        %v288 = vmul.f32 %v281, %v286
        %v289 = vmul.f32 %v285, %v287
        %v290 = vld [vmem:[#allocation5] sm:$0xff]
        %v291 = vld [vmem:[#allocation5 + $0x8] sm:$0xff]
        %v292 = vmul.f32 %v281, %v290
        %v293 = vmul.f32 %v285, %v291
        %v294 = vlaneseq
        %v295 = vshrl.u32 %v294, 7
        %v296 = vsub.s32 1, %v295
        %v297 = vrot.slane %v270, %v296
        %299 = vbcast.lane.b32.xlu0 %v297, 256
        %v300 = vpop.permute.xlu0 %299
        %v301 = vlaneseq
        %v302 = vshrl.u32 %v301, 7
        %v303 = vsub.s32 0, %v302
        %v304 = vrot.slane %v300, %v303
        %v305 = vlaneseq
        %v306 = vshrl.u32 %v305, 7
        %v307 = vsub.s32 1, %v306
        %v308 = vrot.slane %v300, %v307
        %s309 = scalar_lea.vmem [#allocation2], 16
        %v310 = vld [vmem:[%s309] sm:$0xff]
        %v311 = vld [vmem:[%s309 + $0x8] sm:$0xff]
        %v312 = vmul.f32 %v304, %v310
        %v313 = vmul.f32 %v308, %v311
        %v314 = vadd.f32 %v288, %v312
        %v315 = vadd.f32 %v289, %v313
        %s316 = scalar_lea.vmem [#allocation5], 16
        %v317 = vld [vmem:[%s316] sm:$0xff]
        %v318 = vld [vmem:[%s316 + $0x8] sm:$0xff]
        %v319 = vmul.f32 %v304, %v317
        %v320 = vmul.f32 %v308, %v318
        %v321 = vadd.f32 %v292, %v319
        %v322 = vadd.f32 %v293, %v320
        %v323 = vlaneseq
        %v324 = vshrl.u32 %v323, 7
        %v325 = vsub.s32 2, %v324
        %v326 = vrot.slane %v270, %v325
        %328 = vbcast.lane.b32.xlu0 %v326, 256
        %v329 = vpop.permute.xlu0 %328
        %v330 = vlaneseq
        %v331 = vshrl.u32 %v330, 7
        %v332 = vsub.s32 0, %v331
        %v333 = vrot.slane %v329, %v332
        %v334 = vlaneseq
        %v335 = vshrl.u32 %v334, 7
        %v336 = vsub.s32 1, %v335
        %v337 = vrot.slane %v329, %v336
        %s338 = scalar_lea.vmem [#allocation2], 32
        %v339 = vld [vmem:[%s338] sm:$0xff]
        %v340 = vld [vmem:[%s338 + $0x8] sm:$0xff]
        %v341 = vmul.f32 %v333, %v339
        %v342 = vmul.f32 %v337, %v340
        %v343 = vadd.f32 %v314, %v341
        %v344 = vadd.f32 %v315, %v342
        %s345 = scalar_lea.vmem [#allocation5], 32
        %v346 = vld [vmem:[%s345] sm:$0xff]
        %v347 = vld [vmem:[%s345 + $0x8] sm:$0xff]
        %v348 = vmul.f32 %v333, %v346
        %v349 = vmul.f32 %v337, %v347
        %v350 = vadd.f32 %v321, %v348
        %v351 = vadd.f32 %v322, %v349
        %v352 = vlaneseq
        %v353 = vshrl.u32 %v352, 7
        %v354 = vsub.s32 3, %v353
        %v355 = vrot.slane %v270, %v354
        %357 = vbcast.lane.b32.xlu0 %v355, 256
        %v358 = vpop.permute.xlu0 %357
        %v359 = vlaneseq
        %v360 = vshrl.u32 %v359, 7
        %v361 = vsub.s32 0, %v360
        %v362 = vrot.slane %v358, %v361
        %v363 = vlaneseq
        %v364 = vshrl.u32 %v363, 7
        %v365 = vsub.s32 1, %v364
        %v366 = vrot.slane %v358, %v365
        %s367 = scalar_lea.vmem [#allocation2], 48
        %v368 = vld [vmem:[%s367] sm:$0xff]
        %v369 = vld [vmem:[%s367 + $0x8] sm:$0xff]
        %v370 = vmul.f32 %v362, %v368
        %v371 = vmul.f32 %v366, %v369
        %v372 = vadd.f32 %v343, %v370
        %v373 = vadd.f32 %v344, %v371
        %s374 = scalar_lea.vmem [#allocation5], 48
        %v375 = vld [vmem:[%s374] sm:$0xff]
        %v376 = vld [vmem:[%s374 + $0x8] sm:$0xff]
        %v377 = vmul.f32 %v362, %v375
        %v378 = vmul.f32 %v366, %v376
        %v379 = vadd.f32 %v350, %v377
        %v380 = vadd.f32 %v351, %v378
        %381 = vst [vmem:[%s254] sm:$0xff] %v372
        %382 = vst [vmem:[%s254 + $0x8] sm:$0xff] %v373
        %383 = vst [vmem:[%s261] sm:$0xff] %v379
        %384 = vst [vmem:[%s261 + $0x8] sm:$0xff] %v380
        %s385 = sand.u32 %s124, 1
        %s386 = scalar_lea.sflag [#allocation4], %s385
        %s387 = sand.u32 %s124, 1
        %s388 = smul.addr %s387, 16
        %s389 = scalar_lea.vmem [#allocation7], %s388
        %s390 = sand.u32 %s152, 1
        %s391 = scalar_lea.sflag [#allocation9], %s390
        %s392 = sand.u32 %s152, 1
        %s393 = smul.addr %s392, 16
        %s394 = scalar_lea.vmem [#allocation8], %s393
        // Predicated region
        $region41: #{tpu_custom_call.1} parent=31 // pred_check
          %p395 = pneg %p134
        $region42: #{tpu_custom_call.1} parent=31 // pred_check_branch
          %397 = sbr.rel (%p395) target = $region44
        $region43: #{tpu_custom_call.1} parent=31 // pred_region
          %s398 = smul.u32 2, %s28
          %s400 = ssub.s32 256, 256
          %401 = vsyncadd %s386, %s400
          %s402 = smul.addr %s29, 4
          %s403 = sadd.s32 %s398, %s402
          %s404 = smul.addr %s403, 64
          %s405 = scalar_lea.hbm %s3, %s404
          %s406 = sshll.u32 %s389, 4
          %s407 = int_to_ptr.vmem [resolvable:$true] %s406
          %412 = dma.vmem_to_hbm [thread:$0]  %s407, 256, %s405, %s386, 128, 128, 8
        $region44: #{tpu_custom_call.1} parent=31 // pred_fallthru
          _
        // Predicated region
        $region45: #{tpu_custom_call.1} parent=31 // pred_check
          %p413 = pneg %p162
        $region46: #{tpu_custom_call.1} parent=31 // pred_check_branch
          %415 = sbr.rel (%p413) target = $region48
        $region47: #{tpu_custom_call.1} parent=31 // pred_region
          %s416 = smul.u32 2, %s28
          %s418 = ssub.s32 256, 256
          %419 = vsyncadd %s391, %s418
          %s420 = smul.addr %s29, 4
          %s421 = sadd.s32 %s416, %s420
          %s422 = smul.addr %s421, 64
          %s423 = scalar_lea.hbm %s4, %s422
          %s424 = sshll.u32 %s394, 4
          %s425 = int_to_ptr.vmem [resolvable:$true] %s424
          %430 = dma.vmem_to_hbm [thread:$0]  %s425, 256, %s423, %s391, 128, 128, 8
        $region48: #{tpu_custom_call.1} parent=31 // pred_fallthru
          _
      $region32: #{tpu_custom_call.1} parent=5 // pred_fallthru
        _
      %p431 = scmp.le.s32.totalorder 2, %s19
      // Predicated region
      $region49: #{tpu_custom_call.1} parent=5 // pred_check
        %p432 = pneg %p431
      $region50: #{tpu_custom_call.1} parent=5 // pred_check_branch
        %434 = sbr.rel (%p432) target = $region52
      $region51: #{tpu_custom_call.1} parent=5 // pred_region
        %s435 = ssub.s32 %s19, 2
        // Predicated region
        $region53: #{tpu_custom_call.1} parent=51 // pred_check
          %p436 = pneg %p140
        $region54: #{tpu_custom_call.1} parent=51 // pred_check_branch
          %438 = sbr.rel (%p436) target = $region56
        $region55: #{tpu_custom_call.1} parent=51 // pred_region
          %s439 = sand.u32 %s125, 1
          %s440 = scalar_lea.sflag [#allocation4], %s439
          %s441 = sand.u32 %s125, 1
          %s442 = smul.addr %s441, 16
          %s443 = scalar_lea.vmem [#allocation7], %s442
          %444 = dma.done %s440, 256
        $region56: #{tpu_custom_call.1} parent=51 // pred_fallthru
          _
        // Predicated region
        $region57: #{tpu_custom_call.1} parent=51 // pred_check
          %p445 = pneg %p168
        $region58: #{tpu_custom_call.1} parent=51 // pred_check_branch
          %447 = sbr.rel (%p445) target = $region60
        $region59: #{tpu_custom_call.1} parent=51 // pred_region
          %s448 = sand.u32 %s153, 1
          %s449 = scalar_lea.sflag [#allocation9], %s448
          %s450 = sand.u32 %s153, 1
          %s451 = smul.addr %s450, 16
          %s452 = scalar_lea.vmem [#allocation8], %s451
          %453 = dma.done %s449, 256
        $region60: #{tpu_custom_call.1} parent=51 // pred_fallthru
          _
      $region52: #{tpu_custom_call.1} parent=5 // pred_fallthru
        _
    $region6: #{tpu_custom_call.1} parent=1 // loop_footer
      %s23 = sadd.s32 1, %s19
    $region7: #{tpu_custom_call.1} parent=1 // loop_footer_branch
      %18 = sbr.rel target = $region3
    $region8: #{tpu_custom_call.1} parent=1 // loop_exit
      _
    %454 = vsyncpa [#allocation3], 1
    %s455 = scalar_lea.sflag [#allocation3], 1
    %456 = vsyncpa %s455, 1
    %457 = vsyncpa [#allocation6], 1
    %458 = vsyncpa [#allocation4], 1
    %s459 = scalar_lea.sflag [#allocation4], 1
    %460 = vsyncpa %s459, 1
    %461 = vsyncpa [#allocation9], 1
    %s462 = scalar_lea.sflag [#allocation9], 1
    %463 = vsyncpa %s462, 1

</llo_original>
